<compile_context>
chip_gen: v7x
topology: tpu7x:2x2x1
jax: 0.10.0
libtpu: 0.0.40
codegen_flags: <defaults>
</compile_context>

<pallas_src>
import jax
import jax.numpy as jnp
from jax import lax
from jax.experimental import pallas as pl
from jax.experimental.pallas import tpu as pltpu


def _band_matrix(seq_len, kernel_size, dtype=jnp.float32):
    """(L, L) matrix A such that moving_mean = A @ x, edge replication included.

    A[t, s] = (1/K) * #{ j in [0, K) : clamp(t + j - pad, 0, L-1) == s }.
    """
    if seq_len == 1:
        return jnp.ones((1, 1), dtype)
    pad = (kernel_size - 1) // 2
    t = jnp.arange(seq_len)[:, None]
    s = jnp.arange(seq_len)[None, :]
    counts = (jnp.abs(t - s) <= pad).astype(dtype)                        # interior taps
    col0 = jnp.clip(pad - t + 1, 0, kernel_size).astype(dtype)            # taps clamped to 0
    colL = jnp.clip(t + pad - seq_len + 2, 0, kernel_size).astype(dtype)  # taps clamped to L-1
    counts = counts.at[:, 0].set(col0[:, 0])
    counts = counts.at[:, seq_len - 1].set(colL[:, 0])
    return counts * (1.0 / kernel_size)


def _decomp_kernel(a_ref, x_ref, res_ref, mean_ref):
    # a_ref: (L, L) f32 band averaging matrix; constant block index -> fetched once.
    # x_ref / res_ref / mean_ref: (b_blk, L, c_blk).
    a = a_ref[...]

    def body(b, carry):
        xb = x_ref[b].astype(jnp.float32)                               # (L, c_blk)
        mean = jnp.dot(a, xb, preferred_element_type=jnp.float32)       # MXU, f32 acc
        mean_ref[b] = mean.astype(mean_ref.dtype)
        res_ref[b] = (xb - mean).astype(res_ref.dtype)
        return carry

    # b_blk is capped at 8; a fully-unrolled short loop keeps vreg pressure flat and
    # gives the scheduler full visibility.
    lax.fori_loop(0, x_ref.shape[0], body, 0, unroll=True)


def series_decomp(x, kernel_size):
    """x: (B, L, C). Returns (res, moving_mean), both (B, L, C)."""
    if kernel_size % 2 != 1:
        raise ValueError(
            "kernel_size must be odd: with pad=(K-1)//2 an even K makes AvgPool1d "
            "return length L-1 and res = x - moving_mean would not shape-match.")
    B, L, C = x.shape
    LANE = 128
    itemsize = jnp.dtype(x.dtype).itemsize
    a_bytes = L * L * 4

    # Generation-aware VMEM budget (v7x: 64 MiB/TC, v5e/v6e: 128 MiB).
    try:
        vmem_cap = int(pltpu.get_tpu_info().vmem_capacity_bytes)
    except Exception:
        vmem_cap = 64 * 1024 * 1024
    vmem_limit = min(48 * 1024 * 1024, vmem_cap // 2)

    # Explicit block budget: 3 live arrays (x, res, mean) x 2 pipeline buffers each,
    # plus a double-buffered copy of A, inside ~80% of the VMEM limit.
    block_budget = max(int(0.8 * vmem_limit) - 2 * a_bytes, 1 << 18)
    # ~3.5 MiB of input per block amortizes the ~0.35us/step grid overhead on this
    # HBM-bound kernel (1 read + 2 writes per element).
    block_cap = min(block_budget // 6, 3_500_000)

    # Channel tiling. No wrapper-side pad / slice of C (that would double -- or for
    # narrow C, ~16x -- the HBM traffic of a memory-bound op). If C is a 128-multiple
    # and too big for the budget, split it into the largest fitting 128-multiple
    # divisor (prefer c_blk == C for fully contiguous HBM blocks); otherwise take the
    # full channel axis as one (possibly lane-masked) block.
    if C % LANE == 0 and L * C * itemsize > block_cap:
        c_blk = LANE
        for cand in range(C, 0, -LANE):
            if C % cand == 0 and L * cand * itemsize <= block_cap:
                c_blk = cand
                break
    else:
        c_blk = C
    n_c = pl.cdiv(C, c_blk)

    # Batch tiling: fill the block budget but cap the in-kernel unroll at 8.
    bytes_per_row = L * c_blk * itemsize
    b_blk = int(max(1, min(B, 8, block_cap // max(bytes_per_row, 1))))
    n_b = pl.cdiv(B, b_blk)

    # Keep >= 2 parallel grid points when possible (feeds both v7x TensorCores).
    if n_b * n_c < 2 and b_blk > 1:
        b_blk = max(1, b_blk // 2)
        n_b = pl.cdiv(B, b_blk)

    # TODO(synk): for very long sequences (L >~ 2048) or v5e at Autoformer-scale L,
    # tile the time axis and multiply only the (tL, tL + 2*pad) band slab of A (or cast
    # A to bf16) so the dense L^2 matmul never becomes the binding unit.
    # TODO(synk): for very narrow C with long L, a (B, C, L) layout (time on lanes,
    # mean = x @ A^T) would give unmasked lane-dense stores at the cost of a transpose.
    a_mat = _band_matrix(L, kernel_size, jnp.float32)

    cost = pl.CostEstimate(
        flops=2 * B * L * L * C + B * L * C,
        transcendentals=0,
        bytes_accessed=3 * B * L * C * itemsize + a_bytes,
    )

    res, mean = pl.pallas_call(
        _decomp_kernel,
        out_shape=(
            jax.ShapeDtypeStruct((B, L, C), x.dtype),
            jax.ShapeDtypeStruct((B, L, C), x.dtype),
        ),
        grid_spec=pltpu.PrefetchScalarGridSpec(
            num_scalar_prefetch=0,
            grid=(n_b, n_c),
            in_specs=[
                # A has a constant block index -> fetched once and kept resident
                # (its default double-buffer is accounted for in block_budget).
                pl.BlockSpec((L, L), lambda bi, ci: (0, 0)),
                pl.BlockSpec((b_blk, L, c_blk), lambda bi, ci: (bi, 0, ci)),
            ],
            out_specs=[
                pl.BlockSpec((b_blk, L, c_blk), lambda bi, ci: (bi, 0, ci)),
                pl.BlockSpec((b_blk, L, c_blk), lambda bi, ci: (bi, 0, ci)),
            ],
        ),
        compiler_params=pltpu.CompilerParams(
            dimension_semantics=("parallel", "parallel"),
            vmem_limit_bytes=vmem_limit,
        ),
        cost_estimate=cost,
    )(a_mat, x)

    return res, mean


def _reference(x, kernel_size):
    pad = (kernel_size - 1) // 2
    front = jnp.repeat(x[:, 0:1, :], pad, axis=1)
    end = jnp.repeat(x[:, -1:, :], pad, axis=1)
    xp = jnp.concatenate([front, x, end], axis=1)
    L = x.shape[1]
    windows = jnp.stack([xp[:, j:j + L, :] for j in range(kernel_size)], axis=0)
    mean = jnp.mean(windows, axis=0)
    return x - mean, mean


if __name__ == "__main__":
    key = jax.random.PRNGKey(0)
    B, L, C = 2, 32, 8
    x = jax.random.normal(key, (B, L, C), dtype=jnp.float32)

    for kernel_size in (5, 25):   # small window and Autoformer-style window
        res, mean = series_decomp(x, kernel_size)
        jax.block_until_ready((res, mean))
        res_ref, mean_ref = _reference(x, kernel_size)
        assert jnp.allclose(mean, mean_ref, atol=1e-5, rtol=1e-5), kernel_size
        assert jnp.allclose(res, res_ref, atol=1e-5, rtol=1e-5), kernel_size

    print("KERNEL_OK")
</pallas_src>

<mosaic_0001>
module attributes {stable_mosaic.version = 11 : i64} {
  func.func @_decomp_kernel(%arg0: i32, %arg1: i32, %arg2: memref<32x32xf32, #tpu.memory_space<vmem>>, %arg3: memref<1x32x8xf32, #tpu.memory_space<vmem>>, %arg4: memref<1x32x8xf32, #tpu.memory_space<vmem>>, %arg5: memref<1x32x8xf32, #tpu.memory_space<vmem>>) attributes {dimension_semantics = [#tpu.dimension_semantics<parallel>, #tpu.dimension_semantics<parallel>], iteration_bounds = array<i64: 2, 1>, scalar_prefetch = 0 : i64, scratch_operands = 0 : i64, tpu.core_type = #tpu.core_type<tc>, window_params = [{pipeline_mode = #tpu.pipeline_mode<synchronous>, transform_indices = @transform_0, window_bounds = array<i64: 32, 32>}, {transform_indices = @transform_1, window_bounds = array<i64: 1, 32, 8>}, {transform_indices = @transform_2, window_bounds = array<i64: 1, 32, 8>}, {transform_indices = @transform_3, window_bounds = array<i64: 1, 32, 8>}]} {
    %c0 = arith.constant 0 : index
    %c0_0 = arith.constant 0 : index
    %0 = vector.load %arg2[%c0, %c0_0] : memref<32x32xf32, #tpu.memory_space<vmem>>, vector<32x32xf32>
    %c0_i32 = arith.constant 0 : i32
    %1 = arith.index_cast %c0_i32 : i32 to index
    %c0_1 = arith.constant 0 : index
    %c0_2 = arith.constant 0 : index
    %2 = vector.load %arg3[%1, %c0_1, %c0_2] : memref<1x32x8xf32, #tpu.memory_space<vmem>>, vector<1x32x8xf32>
    %3 = vector.shape_cast %2 : vector<1x32x8xf32> to vector<32x8xf32>
    %cst = arith.constant dense<0.000000e+00> : vector<32x8xf32>
    %4 = tpu.matmul %0, %3, %cst {dimension_numbers = #tpu.dot_dimension_numbers<[1], [0], [0], [1], [0, 0, 1, 1], [], []>} : vector<32x32xf32>, vector<32x8xf32>, vector<32x8xf32> -> vector<32x8xf32>
    %5 = arith.index_cast %c0_i32 : i32 to index
    %c0_3 = arith.constant 0 : index
    %c0_4 = arith.constant 0 : index
    %6 = vector.load %arg5[%5, %c0_3, %c0_4] : memref<1x32x8xf32, #tpu.memory_space<vmem>>, vector<1x32x8xf32>
    %7 = vector.shape_cast %6 : vector<1x32x8xf32> to vector<32x8xf32>
    %8 = vector.shape_cast %4 : vector<32x8xf32> to vector<1x32x8xf32>
    tpu.vector_store %arg5[%5, %c0_3, %c0_4], %8 {strides = array<i32>} : memref<1x32x8xf32, #tpu.memory_space<vmem>>, vector<1x32x8xf32>,
    %9 = arith.subf %3, %4 : vector<32x8xf32>
    %10 = arith.index_cast %c0_i32 : i32 to index
    %c0_5 = arith.constant 0 : index
    %c0_6 = arith.constant 0 : index
    %11 = vector.load %arg4[%10, %c0_5, %c0_6] : memref<1x32x8xf32, #tpu.memory_space<vmem>>, vector<1x32x8xf32>
    %12 = vector.shape_cast %11 : vector<1x32x8xf32> to vector<32x8xf32>
    %13 = vector.shape_cast %9 : vector<32x8xf32> to vector<1x32x8xf32>
    tpu.vector_store %arg4[%10, %c0_5, %c0_6], %13 {strides = array<i32>} : memref<1x32x8xf32, #tpu.memory_space<vmem>>, vector<1x32x8xf32>,
    %c1_i32 = arith.constant 1 : i32
    return
  }
  func.func @transform_0(%arg0: i32, %arg1: i32) -> (i32, i32) {
    %c0_i32 = arith.constant 0 : i32
    %c0_i32_0 = arith.constant 0 : i32
    %c0_i32_1 = arith.constant 0 : i32
    return %c0_i32, %c0_i32_0 : i32, i32
  }
  func.func @transform_1(%arg0: i32, %arg1: i32) -> (i32, i32, i32) {
    %c0_i32 = arith.constant 0 : i32
    %c0_i32_0 = arith.constant 0 : i32
    return %arg0, %c0_i32, %arg1 : i32, i32, i32
  }
  func.func @transform_2(%arg0: i32, %arg1: i32) -> (i32, i32, i32) {
    %c0_i32 = arith.constant 0 : i32
    %c0_i32_0 = arith.constant 0 : i32
    return %arg0, %c0_i32, %arg1 : i32, i32, i32
  }
  func.func @transform_3(%arg0: i32, %arg1: i32) -> (i32, i32, i32) {
    %c0_i32 = arith.constant 0 : i32
    %c0_i32_0 = arith.constant 0 : i32
    return %arg0, %c0_i32, %arg1 : i32, i32, i32
  }
}

</mosaic_0001>

<llo_original>
// kernel: tpu_custom_call.1
$region0: #{tpu_custom_call.1}
  #allocation0 [shape = 'u32[]', space=smem, size = 0x4, offset = 0x4, fixed_abs, tag = 'smem constant byte address 0x4 - core index']
  #allocation1 [shape = 'u32[144,128]{1,0:T(1,128)}', space=vmem, size = 0x12000, scoped, tag = 'internal scratch']
  %s0 = inlined_call_operand.vmem [shape: f32[32,32], index: 0, kind: input, shape index: {}]
  %s1 = inlined_call_operand.vmem [shape: f32[2,32,8], index: 1, kind: input, shape index: {}]
  %s2 = inlined_call_operand.vmem [shape: f32[2,32,8], index: 2, kind: output, shape index: {0}]
  %s3 = inlined_call_operand.vmem [shape: f32[2,32,8], index: 3, kind: output, shape index: {1}]
  %4 = xla_tuple %s2, %s3
  %s5 = sld [smem:[#allocation0]]
  $region49: #{tpu_custom_call.1} parent=0
    _
  %s7 = ssub.s32 1, %s5
  %s8 = scalar_select 0, %s7, %s5
  loop: start=0, step=1, limit=4
  $region2: #{tpu_custom_call.1} parent=0 // loop_pre_header
    _
  $region3: #{tpu_custom_call.1} parent=0 // loop_header
    %s10 = sphi 0, %s14
    %p11 = scmp.ge.s32.totalorder %s10, 4
    %s17 = sphi 0, %s29
    %s18 = sphi 0, %s25
    %s19 = sphi 0, %s17
    %s20 = sphi 0, %s18
    %s21 = sphi 0, %s19
    %s22 = sphi 0, %s20
    %s30 = sphi 0, %s30
    %s32 = sphi 0, %s30
    %s33 = sphi 0, %s32
    %s47 = sphi 0, %s33
    %s55 = sphi 0, %s57
    %s58 = sphi 0, %s55
    %s59 = sphi 0, %s58
    %s75 = sphi 0, %s59
    %s83 = sphi 0, %s85
    %s86 = sphi 0, %s83
    %s87 = sphi 0, %s86
    %s103 = sphi 0, %s87
    %s111 = sphi 0, %s113
    %s114 = sphi 0, %s111
    %s115 = sphi 0, %s114
    %s131 = sphi 0, %s115
  $region4: #{tpu_custom_call.1} parent=0 // loop_header_branch
    %13 = sbr.rel (%p11) target = $region8
  $region5: #{tpu_custom_call.1} parent=0 // loop_body
    %s15 = ssub.s32 %s10, 1
    %s16 = ssub.s32 %s10, 2
    %s23 = sadd.s32 1, %s18
    %p24 = scmp.ge.s32.totalorder %s23, 1
    %s25 = scalar_select %p24, 0, %s23
    %s26 = sadd.s32 1, %s17
    %s27 = scalar_select %p24, %s26, %s17
    %p28 = scmp.ge.s32.totalorder %s27, 2
    %s29 = scalar_select %p28, 0, %s27
    %s31 = sadd.s32 %s30, 1
    %p34 = scmp.eq.s32.totalorder %s10, 1
    %p35 = scmp.ne.s32.totalorder %s30, %s32
    %p36 = scmp.eq.s32.totalorder %s10, 0
    %p37 = por %p35, %p36
    %p38 = scmp.ne.s32.totalorder %s30, %s32
    %p39 = scmp.eq.s32.totalorder %s15, 1
    %p40 = por %p38, %p39
    %p41 = scmp.ne.s32.totalorder %s32, %s33
    %p42 = scmp.eq.s32.totalorder %s15, 0
    %p43 = por %p41, %p42
    %p44 = scmp.ne.s32.totalorder %s32, %s33
    %p45 = scmp.eq.s32.totalorder %s16, 1
    %p46 = por %p44, %p45
    %p48 = scmp.ne.s32.totalorder %s33, %s47
    %p49 = scmp.eq.s32.totalorder %s16, 0
    %p50 = por %p48, %p49
    %s51 = ssub.s32 %s17, %s29
    %s52 = ssub.s32 %s18, %s25
    %s53 = sor.u32 %s51, %s52
    %p54 = scmp.eq.s32.totalorder %s53, 0
    %s56 = sadd.s32 %s55, 1
    %s57 = scalar_select %p54, %s55, %s56
    %p60 = pneg %p54
    %p61 = scmp.eq.s32.totalorder %s10, 1
    %p62 = por %p60, %p61
    %p63 = scmp.ne.s32.totalorder %s55, %s58
    %p64 = scmp.eq.s32.totalorder %s10, 0
    %p65 = por %p63, %p64
    %p66 = scmp.ne.s32.totalorder %s55, %s58
    %p67 = scmp.eq.s32.totalorder %s15, 1
    %p68 = por %p66, %p67
    %p69 = scmp.ne.s32.totalorder %s58, %s59
    %p70 = scmp.eq.s32.totalorder %s15, 0
    %p71 = por %p69, %p70
    %p72 = scmp.ne.s32.totalorder %s58, %s59
    %p73 = scmp.eq.s32.totalorder %s16, 1
    %p74 = por %p72, %p73
    %p76 = scmp.ne.s32.totalorder %s59, %s75
    %p77 = scmp.eq.s32.totalorder %s16, 0
    %p78 = por %p76, %p77
    %s79 = ssub.s32 %s17, %s29
    %s80 = ssub.s32 %s18, %s25
    %s81 = sor.u32 %s79, %s80
    %p82 = scmp.eq.s32.totalorder %s81, 0
    %s84 = sadd.s32 %s83, 1
    %s85 = scalar_select %p82, %s83, %s84
    %p88 = pneg %p82
    %p89 = scmp.eq.s32.totalorder %s10, 1
    %p90 = por %p88, %p89
    %p91 = scmp.ne.s32.totalorder %s83, %s86
    %p92 = scmp.eq.s32.totalorder %s10, 0
    %p93 = por %p91, %p92
    %p94 = scmp.ne.s32.totalorder %s83, %s86
    %p95 = scmp.eq.s32.totalorder %s15, 1
    %p96 = por %p94, %p95
    %p97 = scmp.ne.s32.totalorder %s86, %s87
    %p98 = scmp.eq.s32.totalorder %s15, 0
    %p99 = por %p97, %p98
    %p100 = scmp.ne.s32.totalorder %s86, %s87
    %p101 = scmp.eq.s32.totalorder %s16, 1
    %p102 = por %p100, %p101
    %p104 = scmp.ne.s32.totalorder %s87, %s103
    %p105 = scmp.eq.s32.totalorder %s16, 0
    %p106 = por %p104, %p105
    %s107 = ssub.s32 %s17, %s29
    %s108 = ssub.s32 %s18, %s25
    %s109 = sor.u32 %s107, %s108
    %p110 = scmp.eq.s32.totalorder %s109, 0
    %s112 = sadd.s32 %s111, 1
    %s113 = scalar_select %p110, %s111, %s112
    %p116 = pneg %p110
    %p117 = scmp.eq.s32.totalorder %s10, 1
    %p118 = por %p116, %p117
    %p119 = scmp.ne.s32.totalorder %s111, %s114
    %p120 = scmp.eq.s32.totalorder %s10, 0
    %p121 = por %p119, %p120
    %p122 = scmp.ne.s32.totalorder %s111, %s114
    %p123 = scmp.eq.s32.totalorder %s15, 1
    %p124 = por %p122, %p123
    %p125 = scmp.ne.s32.totalorder %s114, %s115
    %p126 = scmp.eq.s32.totalorder %s15, 0
    %p127 = por %p125, %p126
    %p128 = scmp.ne.s32.totalorder %s114, %s115
    %p129 = scmp.eq.s32.totalorder %s16, 1
    %p130 = por %p128, %p129
    %p132 = scmp.ne.s32.totalorder %s115, %s131
    %p133 = scmp.eq.s32.totalorder %s16, 0
    %p134 = por %p132, %p133
    %p135 = scmp.le.s32.totalorder 1, %s10
    %p136 = scmp.lt.s32.totalorder %s10, 3
    %p137 = pnand %p135, %p136
    %p138 = pneg %p137
    // Predicated region
    $region9: #{tpu_custom_call.1} parent=5 // pred_check
      _
    $region10: #{tpu_custom_call.1} parent=5 // pred_check_branch
      %140 = sbr.rel (%p137) target = $region12
    $region11: #{tpu_custom_call.1} parent=5 // pred_region
      %s141 = ssub.s32 %s10, 1
      // Predicated region
      $region13: #{tpu_custom_call.1} parent=11 // pred_check
        %p142 = pneg %p43
      $region14: #{tpu_custom_call.1} parent=11 // pred_check_branch
        %144 = sbr.rel (%p142) target = $region16
      $region15: #{tpu_custom_call.1} parent=11 // pred_region
        _
      $region16: #{tpu_custom_call.1} parent=11 // pred_fallthru
        _
    $region12: #{tpu_custom_call.1} parent=5 // pred_fallthru
      _
    %p145 = scmp.lt.s32.totalorder %s10, 2
    // Predicated region
    $region17: #{tpu_custom_call.1} parent=5 // pred_check
      %p146 = pneg %p145
    $region18: #{tpu_custom_call.1} parent=5 // pred_check_branch
      %148 = sbr.rel (%p146) target = $region20
    $region19: #{tpu_custom_call.1} parent=5 // pred_region
      // Predicated region
      $region21: #{tpu_custom_call.1} parent=19 // pred_check
        %p149 = pneg %p65
      $region22: #{tpu_custom_call.1} parent=19 // pred_check_branch
        %151 = sbr.rel (%p149) target = $region24
      $region23: #{tpu_custom_call.1} parent=19 // pred_region
        %p152 = scmp.lt.s32.totalorder %s17, 1
        %s153 = scalar_select %p152, %s17, 1
        %p154 = scmp.lt.s32.totalorder %s18, 0
        %s155 = scalar_select %p154, %s18, 0
        %s156 = smul.addr %s153, 4
        %s157 = sadd.s32 %s155, %s156
        %s158 = smul.addr %s157, 8
        %s159 = scalar_lea.vmem %s1, %s158
      $region24: #{tpu_custom_call.1} parent=19 // pred_fallthru
        _
    $region20: #{tpu_custom_call.1} parent=5 // pred_fallthru
      _
    %p160 = scmp.le.s32.totalorder 1, %s10
    %p161 = scmp.lt.s32.totalorder %s10, 3
    %p162 = pnand %p160, %p161
    %p163 = pneg %p162
    // Predicated region
    $region25: #{tpu_custom_call.1} parent=5 // pred_check
      _
    $region26: #{tpu_custom_call.1} parent=5 // pred_check_branch
      %165 = sbr.rel (%p162) target = $region28
    $region27: #{tpu_custom_call.1} parent=5 // pred_region
      %s166 = ssub.s32 %s10, 1
      %p167 = pneg %p43
      %p168 = pneg %p40
      %p169 = scmp.lt.s32.totalorder %s19, 1
      %s170 = scalar_select %p169, %s19, 1
      %p171 = scmp.lt.s32.totalorder %s20, 0
      %s172 = scalar_select %p171, %s20, 0
      %s173 = smul.addr %s170, 4
      %s174 = sadd.s32 %s172, %s173
      %s175 = smul.addr %s174, 8
      %s176 = scalar_lea.vmem %s1, %s175
      %p177 = pneg %p71
      %p178 = pneg %p68
      %p179 = pneg %p99
      %p180 = pneg %p96
      %p181 = scmp.lt.s32.totalorder %s19, 1
      %s182 = scalar_select %p181, %s19, 1
      %p183 = scmp.lt.s32.totalorder %s20, 0
      %s184 = scalar_select %p183, %s20, 0
      %s185 = smul.addr %s182, 4
      %s186 = sadd.s32 %s184, %s185
      %s187 = smul.addr %s186, 8
      %s188 = scalar_lea.vmem %s2, %s187
      %p189 = pneg %p127
      %p190 = pneg %p124
      %p191 = scmp.lt.s32.totalorder %s19, 1
      %s192 = scalar_select %p191, %s19, 1
      %p193 = scmp.lt.s32.totalorder %s20, 0
      %s194 = scalar_select %p193, %s20, 0
      %s195 = smul.addr %s192, 4
      %s196 = sadd.s32 %s194, %s195
      %s197 = smul.addr %s196, 8
      %s198 = scalar_lea.vmem %s3, %s197
      %p199 = scmp.lt.s32.totalorder %s19, 1
      %s200 = scalar_select %p199, %s19, 1
      %p201 = scmp.lt.s32.totalorder %s20, 0
      %s202 = scalar_select %p201, %s20, 0
      %s203 = smul.addr %s200, 4
      %s204 = sadd.s32 %s202, %s203
      %s205 = smul.addr %s204, 8
      %s206 = scalar_lea.vmem %s1, %s205
      %p207 = scmp.lt.s32.totalorder %s19, 1
      %s208 = scalar_select %p207, %s19, 1
      %p209 = scmp.lt.s32.totalorder %s20, 0
      %s210 = scalar_select %p209, %s20, 0
      %s211 = smul.addr %s208, 4
      %s212 = sadd.s32 %s210, %s211
      %s213 = smul.addr %s212, 8
      %s214 = scalar_lea.vmem %s2, %s213
      %p215 = scmp.lt.s32.totalorder %s19, 1
      %s216 = scalar_select %p215, %s19, 1
      %p217 = scmp.lt.s32.totalorder %s20, 0
      %s218 = scalar_select %p217, %s20, 0
      %s219 = smul.addr %s216, 4
      %s220 = sadd.s32 %s218, %s219
      %s221 = smul.addr %s220, 8
      %s222 = scalar_lea.vmem %s3, %s221
      %v223 = vld [vmem:[%s0] sm:$0xff]
      %v224 = vld [vmem:[%s0 + $0x8] sm:$0xff]
      %v225 = vld [vmem:[%s0 + $0x10] sm:$0xff]
      %v226 = vld [vmem:[%s0 + $0x18] sm:$0xff]
      %v227 = vld [vmem:[%s206] sm:$0xff]
      %v228 = vld [vmem:[%s206 + $0x8] sm:$0xff]
      %v229 = vld [vmem:[%s206 + $0x10] sm:$0xff]
      %v230 = vld [vmem:[%s206 + $0x18] sm:$0xff]
      %vm231 = vcmask 261120
      %v233 = vsel %vm231, %v223, 0
      %v236 = vsel %vm231, %v224, 0
      %v239 = vsel %vm231, %v225, 0
      %v242 = vsel %vm231, %v226, 0
      %244 = vmatprep.subr.mxu0 0.0
      %245 = vmatpush1.msra.mxu0 %v227
      %246 = vmatprep.subr.mxu0 0.0
      %247 = vmatpush1.msra.mxu0 %v228
      %248 = vmatprep.subr.mxu0 0.0
      %249 = vmatpush1.msra.mxu0 %v229
      %250 = vmatprep.subr.mxu0 0.0
      %251 = vmatpush1.msra.mxu0 %v230
      %252 = vmatprep.subr.mxu0 0.0
      %253 = vmatpush1.msra.mxu0 0.0
      %254 = vmatprep.subr.mxu0 0.0
      %255 = vmatpush1.msra.mxu0 0.0
      %256 = vmatprep.subr.mxu0 0.0
      %257 = vmatpush1.msra.mxu0 0.0
      %258 = vmatprep.subr.mxu0 0.0
      %259 = vmatpush1.msra.mxu0 0.0
      %260 = vmatprep.subr.mxu0 0.0
      %261 = vmatpush1.msra.mxu0 0.0
      %262 = vmatprep.subr.mxu0 0.0
      %263 = vmatpush1.msra.mxu0 0.0
      %264 = vmatprep.subr.mxu0 0.0
      %265 = vmatpush1.msra.mxu0 0.0
      %266 = vmatprep.subr.mxu0 0.0
      %267 = vmatpush1.msra.mxu0 0.0
      %268 = vmatprep.subr.mxu0 0.0
      %269 = vmatpush1.msra.mxu0 0.0
      %270 = vmatprep.subr.mxu0 0.0
      %271 = vmatpush1.msra.mxu0 0.0
      %272 = vmatprep.subr.mxu0 0.0
      %273 = vmatpush1.msra.mxu0 0.0
      %274 = vmatprep.subr.mxu0 0.0
      %275 = vmatpush1.msra.mxu0 0.0
      %276 = vmatprep.subr.mxu0 0.0
      %277 = vmatpush1.msra.mxu0 0.0
      %278 = vmatprep.subr.mxu0 0.0
      %279 = vmatpush1.msra.mxu0 0.0
      %280 = vmatprep.subr.mxu0 0.0
      %281 = vmatpush1.msra.mxu0 0.0
      %282 = vmatprep.subr.mxu0 0.0
      %283 = vmatpush1.msra.mxu0 0.0
      %284 = vmatprep.subr.mxu0 0.0
      %285 = vmatpush1.msra.mxu0 0.0
      %286 = vmatprep.subr.mxu0 0.0
      %287 = vmatpush1.msra.mxu0 0.0
      %288 = vmatprep.subr.mxu0 0.0
      %289 = vmatpush1.msra.mxu0 0.0
      %290 = vmatprep.subr.mxu0 0.0
      %291 = vmatpush1.msra.mxu0 0.0
      %292 = vmatprep.subr.mxu0 0.0
      %293 = vmatpush1.msra.mxu0 0.0
      %294 = vmatprep.subr.mxu0 0.0
      %295 = vmatpush1.msra.mxu0 0.0
      %296 = vmatprep.subr.mxu0 0.0
      %297 = vmatpush1.msra.mxu0 0.0
      %298 = vmatprep.subr.mxu0 0.0
      %299 = vmatpush1.msra.mxu0 0.0
      %300 = vmatprep.subr.mxu0 0.0
      %301 = vmatpush1.msra.mxu0 0.0
      %302 = vmatprep.subr.mxu0 0.0
      %303 = vmatpush1.msra.mxu0 0.0
      %304 = vmatprep.subr.mxu0 0.0
      %305 = vmatpush1.msra.mxu0 0.0
      %306 = vmatprep.subr.mxu0 0.0
      %307 = vmatpush1.msra.mxu0 0.0
      %308 = vmatprep.mubr.f32.mxu0 0.0
      %309 = vmatmul.mubr.f32.gmra.mrb[0].mxu0 %v233
      %v310 = vpop.f32.mrb[0].mxu0
      %v311 = vadd.f32 0.0, %v310
      %v312 = vpop.f32.mrb[0].mxu0
      %313 = vmatprep.mubr.f32.mxu0 0.0
      %314 = vmatmul.mubr.f32.gmra.mrb[0].mxu0 %v236
      %v315 = vpop.f32.mrb[0].mxu0
      %v316 = vadd.f32 0.0, %v315
      %v317 = vpop.f32.mrb[0].mxu0
      %318 = vmatprep.mubr.f32.mxu0 0.0
      %319 = vmatmul.mubr.f32.gmra.mrb[0].mxu0 %v239
      %v320 = vpop.f32.mrb[0].mxu0
      %v321 = vadd.f32 0.0, %v320
      %v322 = vpop.f32.mrb[0].mxu0
      %323 = vmatprep.mubr.f32.mxu0 0.0
      %324 = vmatmul.mubr.f32.gmra.mrb[0].mxu0 %v242
      %v325 = vpop.f32.mrb[0].mxu0
      %v326 = vadd.f32 0.0, %v325
      %v327 = vpop.f32.mrb[0].mxu0
      %328 = vdwg.mxu0
      %vm329 = vcmask 64512
      %330 = vst.msk [vmem:[%s222] sm:$0xff] %vm329, %v311
      %331 = vst.msk [vmem:[%s222 + $0x8] sm:$0xff] %vm329, %v316
      %332 = vst.msk [vmem:[%s222 + $0x10] sm:$0xff] %vm329, %v321
      %333 = vst.msk [vmem:[%s222 + $0x18] sm:$0xff] %vm329, %v326
      %v334 = vsub.f32 %v227, %v311
      %v335 = vsub.f32 %v228, %v316
      %v336 = vsub.f32 %v229, %v321
      %v337 = vsub.f32 %v230, %v326
      %338 = vst.msk [vmem:[%s214] sm:$0xff] %vm329, %v334
      %339 = vst.msk [vmem:[%s214 + $0x8] sm:$0xff] %vm329, %v335
      %340 = vst.msk [vmem:[%s214 + $0x10] sm:$0xff] %vm329, %v336
      %341 = vst.msk [vmem:[%s214 + $0x18] sm:$0xff] %vm329, %v337
      %p342 = scmp.lt.s32.totalorder %s19, 1
      %s343 = scalar_select %p342, %s19, 1
      %p344 = scmp.lt.s32.totalorder %s20, 0
      %s345 = scalar_select %p344, %s20, 0
      %s346 = smul.addr %s343, 4
      %s347 = sadd.s32 %s345, %s346
      %s348 = smul.addr %s347, 8
      %s349 = scalar_lea.vmem %s2, %s348
      %p350 = scmp.lt.s32.totalorder %s19, 1
      %s351 = scalar_select %p350, %s19, 1
      %p352 = scmp.lt.s32.totalorder %s20, 0
      %s353 = scalar_select %p352, %s20, 0
      %s354 = smul.addr %s351, 4
      %s355 = sadd.s32 %s353, %s354
      %s356 = smul.addr %s355, 8
      %s357 = scalar_lea.vmem %s3, %s356
      // Predicated region
      $region29: #{tpu_custom_call.1} parent=27 // pred_check
        %p358 = pneg %p96
      $region30: #{tpu_custom_call.1} parent=27 // pred_check_branch
        %360 = sbr.rel (%p358) target = $region32
      $region31: #{tpu_custom_call.1} parent=27 // pred_region
        _
      $region32: #{tpu_custom_call.1} parent=27 // pred_fallthru
        _
      // Predicated region
      $region33: #{tpu_custom_call.1} parent=27 // pred_check
        %p361 = pneg %p124
      $region34: #{tpu_custom_call.1} parent=27 // pred_check_branch
        %363 = sbr.rel (%p361) target = $region36
      $region35: #{tpu_custom_call.1} parent=27 // pred_region
        _
      $region36: #{tpu_custom_call.1} parent=27 // pred_fallthru
        _
    $region28: #{tpu_custom_call.1} parent=5 // pred_fallthru
      _
    %p364 = scmp.le.s32.totalorder 2, %s10
    // Predicated region
    $region37: #{tpu_custom_call.1} parent=5 // pred_check
      %p365 = pneg %p364
    $region38: #{tpu_custom_call.1} parent=5 // pred_check_branch
      %367 = sbr.rel (%p365) target = $region40
    $region39: #{tpu_custom_call.1} parent=5 // pred_region
      %s368 = ssub.s32 %s10, 2
      // Predicated region
      $region41: #{tpu_custom_call.1} parent=39 // pred_check
        %p369 = pneg %p102
      $region42: #{tpu_custom_call.1} parent=39 // pred_check_branch
        %371 = sbr.rel (%p369) target = $region44
      $region43: #{tpu_custom_call.1} parent=39 // pred_region
        %p372 = scmp.lt.s32.totalorder %s21, 1
        %s373 = scalar_select %p372, %s21, 1
        %p374 = scmp.lt.s32.totalorder %s22, 0
        %s375 = scalar_select %p374, %s22, 0
        %s376 = smul.addr %s373, 4
        %s377 = sadd.s32 %s375, %s376
        %s378 = smul.addr %s377, 8
        %s379 = scalar_lea.vmem %s2, %s378
      $region44: #{tpu_custom_call.1} parent=39 // pred_fallthru
        _
      // Predicated region
      $region45: #{tpu_custom_call.1} parent=39 // pred_check
        %p380 = pneg %p130
      $region46: #{tpu_custom_call.1} parent=39 // pred_check_branch
        %382 = sbr.rel (%p380) target = $region48
      $region47: #{tpu_custom_call.1} parent=39 // pred_region
        %p383 = scmp.lt.s32.totalorder %s21, 1
        %s384 = scalar_select %p383, %s21, 1
        %p385 = scmp.lt.s32.totalorder %s22, 0
        %s386 = scalar_select %p385, %s22, 0
        %s387 = smul.addr %s384, 4
        %s388 = sadd.s32 %s386, %s387
        %s389 = smul.addr %s388, 8
        %s390 = scalar_lea.vmem %s3, %s389
      $region48: #{tpu_custom_call.1} parent=39 // pred_fallthru
        _
    $region40: #{tpu_custom_call.1} parent=5 // pred_fallthru
      _
  $region6: #{tpu_custom_call.1} parent=0 // loop_footer
    %s14 = sadd.s32 1, %s10
  $region7: #{tpu_custom_call.1} parent=0 // loop_footer_branch
    %9 = sbr.rel target = $region3
  $region8: #{tpu_custom_call.1} parent=0 // loop_exit
    _

</llo_original>
